<compile_context>
chip_gen: v5e
topology: v5e:2x2
jax: 0.10.0
libtpu: 0.0.40
codegen_flags: <defaults>
</compile_context>

<pallas_src>
import functools

import jax
import jax.numpy as jnp
from jax.experimental import pallas as pl
from jax.experimental.pallas import tpu as pltpu

# ---- problem sizes (small, synthetic) ----
BATCH = 16
INPUT_DIM = 16
N_HIDDEN = 16          # make_small_encoder default
N_VERTICES = 12
N_RAYS = 4
N_GEN = N_VERTICES + N_RAYS
DIM = 4                # ambient dimension of the polyhedron
INV_TEMP = 1.5


def vertexrepr_kernel(x_ref, w1_ref, w2_ref, b2_ref, gens_ref, o_ref,
                      *, n_vertices, inv_temp):
    # encoder: Linear (bias folded into W1 via ones-column) -> ReLU -> Linear
    x = x_ref[...]                                                    # (B, d_in+1)
    h = jnp.maximum(
        jnp.dot(x, w1_ref[...], preferred_element_type=jnp.float32), 0.0)
    gen = jnp.dot(h, w2_ref[...], preferred_element_type=jnp.float32) + b2_ref[...]

    # Lane mask over the generator axis: first n_vertices lanes are "vertex"
    # lanes (softmax), the rest are "ray" lanes (abs). No lane-offset slicing.
    vert_mask = jax.lax.broadcasted_iota(jnp.int32, gen.shape, 1) < n_vertices

    scaled = gen * inv_temp
    logits = jnp.where(vert_mask, scaled, -jnp.inf)
    m = jnp.max(logits, axis=1, keepdims=True)                        # finite (n_vertices>0)
    e = jnp.where(vert_mask, jnp.exp(scaled - m), 0.0)
    denom = jnp.sum(e, axis=1, keepdims=True)
    p = e * pl.reciprocal(denom, approx=False)                        # exact: keeps 1e-5 tol

    # combined generator weights: softmax probs on vertex lanes, |gen| on ray lanes
    w = jnp.where(vert_mask, p, jnp.abs(gen))                         # (B, n_gen)

    # single fused matmul against [vertices; rays]
    o_ref[...] = jnp.dot(w, gens_ref[...],
                         preferred_element_type=jnp.float32).astype(o_ref.dtype)


def vertex_repr_net(x, w1, b1, w2, b2, vertices, rays):
    B, d_in = x.shape
    n_vertices, dim = vertices.shape

    # Host-side input consolidation (7 inputs -> 5):
    #   fold b1 into W1 via the ones-column trick, concat vertices+rays.
    x_aug = jnp.concatenate([x, jnp.ones((B, 1), x.dtype)], axis=1)     # (B, d_in+1)
    w1_aug = jnp.concatenate([w1, b1], axis=0)                          # (d_in+1, n_hidden)
    generators = jnp.concatenate([vertices, rays], axis=0)              # (n_gen, dim)

    kernel = functools.partial(
        vertexrepr_kernel, n_vertices=n_vertices, inv_temp=INV_TEMP)

    vmem = lambda: pl.BlockSpec(memory_space=pltpu.MemorySpace.VMEM)
    # Single-step kernel: no grid, whole arrays resident in VMEM.
    return pl.pallas_call(
        kernel,
        out_shape=jax.ShapeDtypeStruct((B, dim), jnp.float32),
        in_specs=[vmem(), vmem(), vmem(), vmem(), vmem()],
        out_specs=vmem(),
    )(x_aug, w1_aug, w2, b2, generators)


def reference(x, w1, b1, w2, b2, vertices, rays):
    h = jnp.maximum(x @ w1 + b1, 0.0)
    gen = h @ w2 + b2
    gv = jax.nn.softmax(gen[:, :N_VERTICES] * INV_TEMP, axis=1)
    res = gv @ vertices
    res = res + jnp.abs(gen[:, N_VERTICES:]) @ rays
    return res


if __name__ == "__main__":
    key = jax.random.PRNGKey(0)
    k = jax.random.split(key, 8)

    # Deterministic synthetic parameters (shapes follow VertexReprNet.__init__).
    # PyTorch Linear init ~ U(-1/sqrt(fan_in), 1/sqrt(fan_in)); mimic the scale.
    s1 = 1.0 / jnp.sqrt(INPUT_DIM)
    s2 = 1.0 / jnp.sqrt(N_HIDDEN)
    x = jax.random.normal(k[0], (BATCH, INPUT_DIM), jnp.float32)
    w1 = jax.random.uniform(k[1], (INPUT_DIM, N_HIDDEN), jnp.float32, -s1, s1)
    b1 = jax.random.uniform(k[2], (1, N_HIDDEN), jnp.float32, -s1, s1)
    w2 = jax.random.uniform(k[3], (N_HIDDEN, N_GEN), jnp.float32, -s2, s2)
    b2 = jax.random.uniform(k[4], (1, N_GEN), jnp.float32, -s2, s2)
    # TODO(synk): h_to_v_representation(A, b) (cdd/pycddlib vertex enumeration)
    # has no Pallas/JAX equivalent; vertices/rays are synthesized directly.
    vertices = jax.random.normal(k[5], (N_VERTICES, DIM), jnp.float32)
    rays = jnp.abs(jax.random.normal(k[6], (N_RAYS, DIM), jnp.float32))

    out = vertex_repr_net(x, w1, b1, w2, b2, vertices, rays)
    out = jax.block_until_ready(out)

    ref = reference(x, w1, b1, w2, b2, vertices, rays)
    assert out.shape == (BATCH, DIM)
    assert jnp.allclose(out, ref, atol=1e-5, rtol=1e-5)

    print("KERNEL_OK")
</pallas_src>

<mosaic_0001>
module attributes {stable_mosaic.version = 11 : i64} {
  func.func @vertexrepr_kernel(%arg0: memref<16x17xf32, #tpu.memory_space<vmem>>, %arg1: memref<17x16xf32, #tpu.memory_space<vmem>>, %arg2: memref<16x16xf32, #tpu.memory_space<vmem>>, %arg3: memref<1x16xf32, #tpu.memory_space<vmem>>, %arg4: memref<16x4xf32, #tpu.memory_space<vmem>>, %arg5: memref<16x4xf32, #tpu.memory_space<vmem>>) attributes {dimension_semantics = [], scalar_prefetch = 0 : i64, scratch_operands = 0 : i64, tpu.core_type = #tpu.core_type<tc>} {
    %c0 = arith.constant 0 : index
    %c0_0 = arith.constant 0 : index
    %0 = vector.load %arg0[%c0, %c0_0] : memref<16x17xf32, #tpu.memory_space<vmem>>, vector<16x17xf32>
    %c0_1 = arith.constant 0 : index
    %c0_2 = arith.constant 0 : index
    %1 = vector.load %arg1[%c0_1, %c0_2] : memref<17x16xf32, #tpu.memory_space<vmem>>, vector<17x16xf32>
    %cst = arith.constant dense<0.000000e+00> : vector<16x16xf32>
    %2 = tpu.matmul %0, %1, %cst {dimension_numbers = #tpu.dot_dimension_numbers<[1], [0], [0], [1], [0, 0, 1, 1], [], []>} : vector<16x17xf32>, vector<17x16xf32>, vector<16x16xf32> -> vector<16x16xf32>
    %cst_3 = arith.constant 0.000000e+00 : f32
    %3 = vector.broadcast %cst_3 : f32 to vector<16x16xf32>
    %4 = arith.maximumf %2, %3 : vector<16x16xf32>
    %c0_4 = arith.constant 0 : index
    %c0_5 = arith.constant 0 : index
    %5 = vector.load %arg2[%c0_4, %c0_5] : memref<16x16xf32, #tpu.memory_space<vmem>>, vector<16x16xf32>
    %cst_6 = arith.constant dense<0.000000e+00> : vector<16x16xf32>
    %6 = tpu.matmul %4, %5, %cst_6 {dimension_numbers = #tpu.dot_dimension_numbers<[1], [0], [0], [1], [0, 0, 1, 1], [], []>} : vector<16x16xf32>, vector<16x16xf32>, vector<16x16xf32> -> vector<16x16xf32>
    %c0_7 = arith.constant 0 : index
    %c0_8 = arith.constant 0 : index
    %7 = vector.load %arg3[%c0_7, %c0_8] : memref<1x16xf32, #tpu.memory_space<vmem>>, vector<1x16xf32>
    %8 = vector.broadcast %7 : vector<1x16xf32> to vector<16x16xf32>
    %9 = arith.addf %6, %8 : vector<16x16xf32>
    %10 = tpu.iota {dimensions = array<i32: 1>} : vector<16x16xi32>
    %c12_i32 = arith.constant 12 : i32
    %11 = vector.broadcast %c12_i32 : i32 to vector<16x16xi32>
    %12 = arith.cmpi slt, %10, %11 : vector<16x16xi32>
    %cst_9 = arith.constant 1.500000e+00 : f32
    %13 = vector.broadcast %cst_9 : f32 to vector<16x16xf32>
    %14 = arith.mulf %9, %13 : vector<16x16xf32>
    %cst_10 = arith.constant 0xFF800000 : f32
    %15 = vector.broadcast %cst_10 : f32 to vector<16x16xf32>
    %16 = arith.select %12, %14, %15 : vector<16x16xi1>, vector<16x16xf32>
    %cst_11 = arith.constant dense<0xFF800000> : vector<16xf32>
    %17 = vector.multi_reduction <maximumf>, %16, %cst_11 [1] : vector<16x16xf32> to vector<16xf32>
    %18 = vector.shape_cast %17 : vector<16xf32> to vector<16x1xf32>
    %19 = vector.broadcast %18 : vector<16x1xf32> to vector<16x16xf32>
    %20 = arith.subf %14, %19 : vector<16x16xf32>
    %21 = math.exp %20 : vector<16x16xf32>
    %cst_12 = arith.constant 0.000000e+00 : f32
    %22 = vector.broadcast %cst_12 : f32 to vector<16x16xf32>
    %23 = arith.select %12, %21, %22 : vector<16x16xi1>, vector<16x16xf32>
    %cst_13 = arith.constant dense<0.000000e+00> : vector<16xf32>
    %24 = vector.multi_reduction <add>, %23, %cst_13 [1] : vector<16x16xf32> to vector<16xf32>
    %25 = vector.shape_cast %24 : vector<16xf32> to vector<16x1xf32>
    %26 = tpu.reciprocal %25 : vector<16x1xf32> -> vector<16x1xf32>
    %27 = vector.broadcast %26 : vector<16x1xf32> to vector<16x16xf32>
    %28 = arith.mulf %23, %27 : vector<16x16xf32>
    %29 = math.absf %9 : vector<16x16xf32>
    %30 = arith.select %12, %28, %29 : vector<16x16xi1>, vector<16x16xf32>
    %c0_14 = arith.constant 0 : index
    %c0_15 = arith.constant 0 : index
    %31 = vector.load %arg4[%c0_14, %c0_15] : memref<16x4xf32, #tpu.memory_space<vmem>>, vector<16x4xf32>
    %cst_16 = arith.constant dense<0.000000e+00> : vector<16x4xf32>
    %32 = tpu.matmul %30, %31, %cst_16 {dimension_numbers = #tpu.dot_dimension_numbers<[1], [0], [0], [1], [0, 0, 1, 1], [], []>} : vector<16x16xf32>, vector<16x4xf32>, vector<16x4xf32> -> vector<16x4xf32>
    %c0_17 = arith.constant 0 : index
    %c0_18 = arith.constant 0 : index
    %33 = vector.load %arg5[%c0_17, %c0_18] : memref<16x4xf32, #tpu.memory_space<vmem>>, vector<16x4xf32>
    tpu.vector_store %arg5[%c0_17, %c0_18], %32 {strides = array<i32>} : memref<16x4xf32, #tpu.memory_space<vmem>>, vector<16x4xf32>,
    return
  }
}

</mosaic_0001>

<llo_original>
// kernel: tpu_custom_call.1
$region0: #{tpu_custom_call.1}
  #allocation0 [shape = 'u32[]', space=smem, size = 0x4, offset = 0x4, fixed_abs, tag = 'smem constant byte address 0x4 - core index']
  #allocation1 [shape = 'u32[72,128]{1,0:T(1,128)}', space=vmem, size = 0x9000, scoped, tag = 'internal scratch']
  %s0 = inlined_call_operand.vmem [shape: f32[16,17], index: 0, kind: input, shape index: {}]
  %s1 = inlined_call_operand.vmem [shape: f32[17,16], index: 1, kind: input, shape index: {}]
  %s2 = inlined_call_operand.vmem [shape: f32[16,16], index: 2, kind: input, shape index: {}]
  %s3 = inlined_call_operand.vmem [shape: f32[1,16], index: 3, kind: input, shape index: {}]
  %s4 = inlined_call_operand.vmem [shape: f32[16,4], index: 4, kind: input, shape index: {}]
  %s5 = inlined_call_operand.vmem [shape: f32[16,4], index: 5, kind: output, shape index: {}]
  %s6 = sld [smem:[#allocation0]]
  $region30: #{tpu_custom_call.1} parent=0
    _
  %s8 = ssub.s32 1, %s6
  %s9 = scalar_select 0, %s8, %s6
  // Predicated region
  $region2: #{tpu_custom_call.1} parent=0 // pred_check
    _
  $region3: #{tpu_custom_call.1} parent=0 // pred_check_branch
    %11 = sbr.rel (0) target = $region5
  $region4: #{tpu_custom_call.1} parent=0 // pred_region
    _
  $region5: #{tpu_custom_call.1} parent=0 // pred_fallthru
    _
  // Predicated region
  $region6: #{tpu_custom_call.1} parent=0 // pred_check
    _
  $region7: #{tpu_custom_call.1} parent=0 // pred_check_branch
    %13 = sbr.rel (0) target = $region9
  $region8: #{tpu_custom_call.1} parent=0 // pred_region
    _
  $region9: #{tpu_custom_call.1} parent=0 // pred_fallthru
    _
  // Predicated region
  $region10: #{tpu_custom_call.1} parent=0 // pred_check
    _
  $region11: #{tpu_custom_call.1} parent=0 // pred_check_branch
    %15 = sbr.rel (0) target = $region13
  $region12: #{tpu_custom_call.1} parent=0 // pred_region
    _
  $region13: #{tpu_custom_call.1} parent=0 // pred_fallthru
    _
  // Predicated region
  $region14: #{tpu_custom_call.1} parent=0 // pred_check
    _
  $region15: #{tpu_custom_call.1} parent=0 // pred_check_branch
    %17 = sbr.rel (0) target = $region17
  $region16: #{tpu_custom_call.1} parent=0 // pred_region
    _
  $region17: #{tpu_custom_call.1} parent=0 // pred_fallthru
    _
  // Predicated region
  $region18: #{tpu_custom_call.1} parent=0 // pred_check
    _
  $region19: #{tpu_custom_call.1} parent=0 // pred_check_branch
    %19 = sbr.rel (0) target = $region21
  $region20: #{tpu_custom_call.1} parent=0 // pred_region
    _
  $region21: #{tpu_custom_call.1} parent=0 // pred_fallthru
    _
  %v20 = vld [vmem:[%s0] sm:$0xff]
  %v21 = vld [vmem:[%s0 + $0x8] sm:$0xff]
  %v22 = vld [vmem:[%s1] sm:$0xff]
  %v23 = vld [vmem:[%s1 + $0x8] sm:$0xff]
  %v24 = vld [vmem:[%s1 + $0x10] sm:$0x1]
  %vm25 = vcmask 138240
  %v27 = vsel %vm25, %v20, 0
  %v30 = vsel %vm25, %v21, 0
  %vm32 = vcmask 1040384
  %v34 = vsel %vm32, %v24, 0
  %36 = vmatpush.msra.mxu0 0.0
  %37 = vmatpush.msra.mxu0 0.0
  %38 = vmatpush.msra.mxu0 0.0
  %39 = vmatpush.msra.mxu0 0.0
  %40 = vmatpush.msra.mxu0 0.0
  %41 = vmatpush.msra.mxu0 0.0
  %42 = vmatpush.msra.mxu0 0.0
  %43 = vmatpush.msra.mxu0 0.0
  %44 = vmatpush.msra.mxu0 0.0
  %45 = vmatpush.msra.mxu0 0.0
  %46 = vmatpush.msra.mxu0 0.0
  %47 = vmatpush.msra.mxu0 0.0
  %48 = vmatpush.msra.mxu0 0.0
  %49 = vmatpush.msra.mxu0 %v34
  %50 = vmatpush.msra.mxu0 %v23
  %51 = vmatpush.msra.mxu0 %v22
  %52 = vmatmul.f32.gmra.mxu0 %v27
  %v53 = vpop.f32.mrf.mxu0
  %v54 = vadd.f32 0.0, %v53
  %55 = vmatmul.f32.gmra.mxu0 %v30
  %v56 = vpop.f32.mrf.mxu0
  %v57 = vadd.f32 0.0, %v56
  %58 = vdwg.mxu0
  %v59 = vmax.f32 %v54, 0.0
  %v60 = vmax.f32 %v57, 0.0
  %v61 = vld [vmem:[%s2] sm:$0xff]
  %v62 = vld [vmem:[%s2 + $0x8] sm:$0xff]
  %v63 = vld [vmem:[%s3] sm:$0x1]
  %v65 = vperm.slane %v63, 0
  %vm67 = vcmask 130048
  %v69 = vsel %vm67, %v59, 0
  %v72 = vsel %vm67, %v60, 0
  %74 = vmatpush.msra.mxu0 0.0
  %75 = vmatpush.msra.mxu0 0.0
  %76 = vmatpush.msra.mxu0 0.0
  %77 = vmatpush.msra.mxu0 0.0
  %78 = vmatpush.msra.mxu0 0.0
  %79 = vmatpush.msra.mxu0 0.0
  %80 = vmatpush.msra.mxu0 0.0
  %81 = vmatpush.msra.mxu0 0.0
  %82 = vmatpush.msra.mxu0 0.0
  %83 = vmatpush.msra.mxu0 0.0
  %84 = vmatpush.msra.mxu0 0.0
  %85 = vmatpush.msra.mxu0 0.0
  %86 = vmatpush.msra.mxu0 0.0
  %87 = vmatpush.msra.mxu0 0.0
  %88 = vmatpush.msra.mxu0 %v62
  %89 = vmatpush.msra.mxu0 %v61
  %90 = vmatmul.f32.gmra.mxu0 %v69
  %v91 = vpop.f32.mrf.mxu0
  %v92 = vadd.f32 %v65, %v91
  %93 = vmatmul.f32.gmra.mxu0 %v72
  %v94 = vpop.f32.mrf.mxu0
  %v95 = vadd.f32 %v65, %v94
  %96 = vdwg.mxu0
  %v97 = vlaneseq
  %v98 = vand.u32 %v97, 127
  %vm99 = vcmp.lt.s32.totalorder %v98, 12
  %v100 = vmul.f32 %v92, 1.5
  %v101 = vmul.f32 %v95, 1.5
  %v102 = vsel %vm99, %v100, -inf
  %v103 = vsel %vm99, %v101, -inf
  %v104 = vsel %vm67, %v102, -inf
  %105 = vmax.xlane.f32.xlu0 %v104
  %v106 = vpop.xlane.xlu0 %105
  %v107 = vsel %vm67, %v103, -inf
  %108 = vmax.xlane.f32.xlu0 %v107
  %v109 = vpop.xlane.xlu0 %108
  %v110 = vsub.f32 %v100, %v106
  %v111 = vsub.f32 %v101, %v109
  %v112 = vmul.f32 %v110, 1.442695
  %v113 = vpow.pop %v112
  %v114 = vmul.f32 %v111, 1.442695
  %v115 = vpow.pop %v114
  %v116 = vsel %vm99, %v113, 0.0
  %v117 = vsel %vm99, %v115, 0.0
  %v118 = vsel %vm67, %v116, 0.0
  %119 = vadd.xlane.f32.xlu0 %v118
  %v120 = vpop.xlane.xlu0 %119
  %v121 = vsel %vm67, %v117, 0.0
  %122 = vadd.xlane.f32.xlu0 %v121
  %v123 = vpop.xlane.xlu0 %122
  %v124 = vrcp.pop %v120
  %v125 = vmul.f32 %v120, %v124
  %v126 = vsub.f32 1.0, %v125
  %v127 = vmul.f32 %v124, %v126
  %v128 = vadd.f32 %v124, %v127
  %vm129 = vweird.f32 %v120
  %vm130 = vweird.f32 %v124
  %vm131 = vmor %vm129, %vm130
  %v132 = vsel %vm131, %v124, %v128
  %v133 = vand.u32 2147483647, %v120
  %vm134 = vcmp.eq.f32.partialorder %v133, 8.507059e+37
  %v135 = vand.u32 %v120, 2147483648
  %v136 = vor.u32 1.1754944e-38, %v135
  %v137 = vsel %vm134, %v136, %v132
  %v138 = vrcp.pop %v123
  %v139 = vmul.f32 %v123, %v138
  %v140 = vsub.f32 1.0, %v139
  %v141 = vmul.f32 %v138, %v140
  %v142 = vadd.f32 %v138, %v141
  %vm143 = vweird.f32 %v123
  %vm144 = vweird.f32 %v138
  %vm145 = vmor %vm143, %vm144
  %v146 = vsel %vm145, %v138, %v142
  %v147 = vand.u32 2147483647, %v123
  %vm148 = vcmp.eq.f32.partialorder %v147, 8.507059e+37
  %v149 = vand.u32 %v123, 2147483648
  %v150 = vor.u32 1.1754944e-38, %v149
  %v151 = vsel %vm148, %v150, %v146
  %v152 = vmul.f32 %v116, %v137
  %v153 = vmul.f32 %v117, %v151
  %v154 = vand.u32 2147483647, %v92
  %v155 = vand.u32 2147483647, %v95
  %v156 = vsel %vm99, %v152, %v154
  %v157 = vsel %vm99, %v153, %v155
  %v158 = vld [vmem:[%s4] sm:$0xff]
  %v159 = vld [vmem:[%s4 + $0x8] sm:$0xff]
  %v161 = vsel %vm67, %v156, 0
  %v164 = vsel %vm67, %v157, 0
  %166 = vmatpush.msra.mxu0 0.0
  %167 = vmatpush.msra.mxu0 0.0
  %168 = vmatpush.msra.mxu0 0.0
  %169 = vmatpush.msra.mxu0 0.0
  %170 = vmatpush.msra.mxu0 0.0
  %171 = vmatpush.msra.mxu0 0.0
  %172 = vmatpush.msra.mxu0 0.0
  %173 = vmatpush.msra.mxu0 0.0
  %174 = vmatpush.msra.mxu0 0.0
  %175 = vmatpush.msra.mxu0 0.0
  %176 = vmatpush.msra.mxu0 0.0
  %177 = vmatpush.msra.mxu0 0.0
  %178 = vmatpush.msra.mxu0 0.0
  %179 = vmatpush.msra.mxu0 0.0
  %180 = vmatpush.msra.mxu0 %v159
  %181 = vmatpush.msra.mxu0 %v158
  %182 = vmatmul.f32.gmra.mxu0 %v161
  %v183 = vpop.f32.mrf.mxu0
  %v184 = vadd.f32 0.0, %v183
  %185 = vmatmul.f32.gmra.mxu0 %v164
  %v186 = vpop.f32.mrf.mxu0
  %v187 = vadd.f32 0.0, %v186
  %188 = vdwg.mxu0
  %vm189 = vcmask 31744
  %190 = vst.msk [vmem:[%s5] sm:$0xff] %vm189, %v184
  %191 = vst.msk [vmem:[%s5 + $0x8] sm:$0xff] %vm189, %v187
  // Predicated region
  $region22: #{tpu_custom_call.1} parent=0 // pred_check
    _
  $region23: #{tpu_custom_call.1} parent=0 // pred_check_branch
    %193 = sbr.rel (0) target = $region25
  $region24: #{tpu_custom_call.1} parent=0 // pred_region
    _
  $region25: #{tpu_custom_call.1} parent=0 // pred_fallthru
    _
  // Predicated region
  $region26: #{tpu_custom_call.1} parent=0 // pred_check
    _
  $region27: #{tpu_custom_call.1} parent=0 // pred_check_branch
    %195 = sbr.rel (0) target = $region29
  $region28: #{tpu_custom_call.1} parent=0 // pred_region
    _
  $region29: #{tpu_custom_call.1} parent=0 // pred_fallthru
    _

</llo_original>
